<compile_context>
chip_gen: v6e
topology: v6e:2x2x1
jax: 0.10.0
libtpu: 0.0.40
codegen_flags: <defaults>
</compile_context>

<pallas_src>
import jax
import jax.numpy as jnp
from jax.experimental import pallas as pl
from jax.experimental.pallas import tpu as pltpu

_LANE = 128       # f32 lane width
_TM_CAP = 512     # cap on the mode-block tile (keeps resident VMEM modest)


def _round_up(x, m):
    return ((x + m - 1) // m) * m


def _pick_m_tiling(m):
    """Return (tile_m, padded_m): padded_m % tile_m == 0, tile_m % 128 == 0."""
    if m <= _TM_CAP:
        tm = _round_up(m, _LANE)
        return tm, tm
    return _TM_CAP, _round_up(m, _TM_CAP)


def _compl_mul_kernel(xr_ref, xi_ref, wr_ref, wi_ref, or_ref, oi_ref):
    """One (mode-block, input-channel) grid step of the complex contraction.

    xr/xi : (B, TM)        real/imag of input channel i of the truncated spectrum
    wr/wi : (Cout, TM)     real/imag of the weights for input channel i
    or/oi : (B, Cout, TM)  output blocks, resident across the Cin grid axis
    """
    i = pl.program_id(1)

    @pl.when(i == 0)
    def _init():
        or_ref[...] = jnp.zeros_like(or_ref)
        oi_ref[...] = jnp.zeros_like(oi_ref)

    xr = xr_ref[...][:, None, :]      # (B, 1, TM)    broadcasts over Cout
    xi = xi_ref[...][:, None, :]
    wr = wr_ref[...][None, :, :]      # (1, Cout, TM) broadcasts over B
    wi = wi_ref[...][None, :, :]

    # (a+ib)(c+id) = (ac - bd) + i(ad + bc), accumulated over input channels.
    or_ref[...] += xr * wr - xi * wi
    oi_ref[...] += xr * wi + xi * wr


def _compl_mul2d_pallas(xr, xi, wr, wi, tm):
    """xr/xi: (Cin, B, M_pad) f32; wr/wi: (Cin, Cout, M_pad) f32.

    Returns (out_r, out_i), each (B, Cout, M_pad) f32, where
        out[b, o, m] = sum_i x[i, b, m] * w[i, o, m]   (complex).
    """
    Cin, B, M_pad = xr.shape
    Cout = wr.shape[1]
    assert M_pad % tm == 0
    n_m = M_pad // tm

    x_spec = pl.BlockSpec((None, B, tm), lambda m, i: (i, 0, m))
    w_spec = pl.BlockSpec((None, Cout, tm), lambda m, i: (i, 0, m))
    # Output block index is constant across the Cin axis -> resident accumulator.
    o_spec = pl.BlockSpec((B, Cout, tm), lambda m, i: (0, 0, m))

    out_shape = (
        jax.ShapeDtypeStruct((B, Cout, M_pad), jnp.float32),
        jax.ShapeDtypeStruct((B, Cout, M_pad), jnp.float32),
    )

    return pl.pallas_call(
        _compl_mul_kernel,
        out_shape=out_shape,
        grid_spec=pltpu.PrefetchScalarGridSpec(
            num_scalar_prefetch=0,
            grid=(n_m, Cin),                      # reduction axis (Cin) last
            in_specs=[x_spec, x_spec, w_spec, w_spec],
            out_specs=(o_spec, o_spec),
        ),
        compiler_params=pltpu.CompilerParams(
            dimension_semantics=("parallel", "arbitrary"),
            vmem_limit_bytes=64 * 1024 * 1024,
        ),
    )(xr, xi, wr, wi)


def spectral_conv2d(x, w1r, w1i, w2r, w2i, modes1, modes2):
    """Forward pass equivalent to the PyTorch SpectralConv2d.

    x: (B, Cin, H, W) float32  (NCHW)
    w1*/w2*: (Cin, Cout, modes1, modes2) float32 real/imag parts
    returns: (B, Cout, H, W) float32
    """
    B, Cin, H, W = x.shape
    Cout = w1r.shape[1]
    if modes1 > H // 2 or modes2 > W // 2 + 1:
        raise ValueError("modes1/modes2 exceed the available spectrum")

    # TODO(synk): FFT/iFFT have no Pallas TPU equivalent; kept in plain JAX.
    x_ft = jnp.fft.rfft2(x)                        # (B, Cin, H, W//2+1) complex64

    # Gather both retained mode corners (tiny truncated spectrum).
    top = x_ft[:, :, :modes1, :modes2]             # low positive freqs (dim -2)
    bot = x_ft[:, :, H - modes1:, :modes2]         # low negative freqs (dim -2)
    x_blk = jnp.concatenate([top, bot], axis=2)    # (B, Cin, 2*m1, m2)

    M = 2 * modes1 * modes2
    tm, M_pad = _pick_m_tiling(M)
    pad = M_pad - M

    # Lane-dense layouts: flatten modes into the last axis, pad to 128 lanes.
    x_flat = jnp.transpose(x_blk, (1, 0, 2, 3)).reshape(Cin, B, M)
    xr = jnp.real(x_flat).astype(jnp.float32)
    xi = jnp.imag(x_flat).astype(jnp.float32)

    wr = jnp.concatenate([w1r, w2r], axis=2).reshape(Cin, Cout, M).astype(jnp.float32)
    wi = jnp.concatenate([w1i, w2i], axis=2).reshape(Cin, Cout, M).astype(jnp.float32)

    if pad:
        xr = jnp.pad(xr, ((0, 0), (0, 0), (0, pad)))
        xi = jnp.pad(xi, ((0, 0), (0, 0), (0, pad)))
        wr = jnp.pad(wr, ((0, 0), (0, 0), (0, pad)))
        wi = jnp.pad(wi, ((0, 0), (0, 0), (0, pad)))

    out_r, out_i = _compl_mul2d_pallas(xr, xi, wr, wi, tm)    # (B, Cout, M_pad)

    out_blk = (out_r[:, :, :M] + 1j * out_i[:, :, :M]).astype(jnp.complex64)
    out_blk = out_blk.reshape(B, Cout, 2 * modes1, modes2)

    out_ft = jnp.zeros((B, Cout, H, W // 2 + 1), jnp.complex64)
    out_ft = out_ft.at[:, :, :modes1, :modes2].set(out_blk[:, :, :modes1])
    out_ft = out_ft.at[:, :, H - modes1:, :modes2].set(out_blk[:, :, modes1:])

    return jnp.fft.irfft2(out_ft, s=(H, W))        # (B, Cout, H, W) float32


def _reference(x, w1r, w1i, w2r, w2i, modes1, modes2):
    """Pure-JAX reference (mirrors the PyTorch forward exactly)."""
    B, Cin, H, W = x.shape
    Cout = w1r.shape[1]
    w1 = w1r + 1j * w1i
    w2 = w2r + 1j * w2i
    x_ft = jnp.fft.rfft2(x)
    out_ft = jnp.zeros((B, Cout, H, W // 2 + 1), jnp.complex64)
    out_ft = out_ft.at[:, :, :modes1, :modes2].set(
        jnp.einsum('bixy,ioxy->boxy', x_ft[:, :, :modes1, :modes2], w1))
    out_ft = out_ft.at[:, :, H - modes1:, :modes2].set(
        jnp.einsum('bixy,ioxy->boxy', x_ft[:, :, H - modes1:, :modes2], w2))
    return jnp.fft.irfft2(out_ft, s=(H, W))


if __name__ == "__main__":
    # Small deterministic config consistent with the module's __init__.
    B, Cin, Cout, H, W = 2, 4, 4, 16, 16
    modes1, modes2 = 6, 6
    scale = 1.0 / (Cin * Cout)

    key = jax.random.PRNGKey(0)
    kx, k1r, k1i, k2r, k2i = jax.random.split(key, 5)

    x = jax.random.normal(kx, (B, Cin, H, W), dtype=jnp.float32)
    # torch.rand(..., dtype=cfloat): real and imag parts uniform in [0,1), scaled.
    w1r = scale * jax.random.uniform(k1r, (Cin, Cout, modes1, modes2), jnp.float32)
    w1i = scale * jax.random.uniform(k1i, (Cin, Cout, modes1, modes2), jnp.float32)
    w2r = scale * jax.random.uniform(k2r, (Cin, Cout, modes1, modes2), jnp.float32)
    w2i = scale * jax.random.uniform(k2i, (Cin, Cout, modes1, modes2), jnp.float32)

    y = spectral_conv2d(x, w1r, w1i, w2r, w2i, modes1, modes2)
    y = jax.block_until_ready(y)

    y_ref = jax.block_until_ready(_reference(x, w1r, w1i, w2r, w2i, modes1, modes2))
    assert y.shape == (B, Cout, H, W)
    assert jnp.allclose(y, y_ref, atol=1e-4, rtol=1e-4)

    print("KERNEL_OK")
</pallas_src>

<mosaic_0001>
module attributes {stable_mosaic.version = 11 : i64} {
  func.func @_compl_mul_kernel(%arg0: i32, %arg1: i32, %arg2: memref<1x2x128xf32, #tpu.memory_space<vmem>>, %arg3: memref<1x2x128xf32, #tpu.memory_space<vmem>>, %arg4: memref<1x4x128xf32, #tpu.memory_space<vmem>>, %arg5: memref<1x4x128xf32, #tpu.memory_space<vmem>>, %arg6: memref<2x4x128xf32, #tpu.memory_space<vmem>>, %arg7: memref<2x4x128xf32, #tpu.memory_space<vmem>>) attributes {dimension_semantics = [#tpu.dimension_semantics<parallel>, #tpu.dimension_semantics<arbitrary>], iteration_bounds = array<i64: 1, 4>, scalar_prefetch = 0 : i64, scratch_operands = 0 : i64, tpu.core_type = #tpu.core_type<tc>, window_params = [{transform_indices = @transform_0, window_bounds = array<i64: 1, 2, 128>}, {transform_indices = @transform_1, window_bounds = array<i64: 1, 2, 128>}, {transform_indices = @transform_2, window_bounds = array<i64: 1, 4, 128>}, {transform_indices = @transform_3, window_bounds = array<i64: 1, 4, 128>}, {transform_indices = @transform_4, window_bounds = array<i64: 2, 4, 128>}, {transform_indices = @transform_5, window_bounds = array<i64: 2, 4, 128>}]} {
    %c0_i32 = arith.constant 0 : i32
    %0 = arith.cmpi eq, %arg1, %c0_i32 : i32
    %1 = arith.extui %0 : i1 to i32
    %c0_i32_0 = arith.constant 0 : i32
    %2 = arith.cmpi ne, %1, %c0_i32_0 : i32
    scf.if %2 {
      %cst = arith.constant 0.000000e+00 : f32
      %35 = vector.broadcast %cst : f32 to vector<2x4x128xf32>
      %c0_24 = arith.constant 0 : index
      %c0_25 = arith.constant 0 : index
      %c0_26 = arith.constant 0 : index
      %36 = vector.load %arg6[%c0_24, %c0_25, %c0_26] : memref<2x4x128xf32, #tpu.memory_space<vmem>>, vector<2x4x128xf32>
      tpu.vector_store %arg6[%c0_24, %c0_25, %c0_26], %35 {strides = array<i32>} : memref<2x4x128xf32, #tpu.memory_space<vmem>>, vector<2x4x128xf32>,
      %cst_27 = arith.constant 0.000000e+00 : f32
      %37 = vector.broadcast %cst_27 : f32 to vector<2x4x128xf32>
      %c0_28 = arith.constant 0 : index
      %c0_29 = arith.constant 0 : index
      %c0_30 = arith.constant 0 : index
      %38 = vector.load %arg7[%c0_28, %c0_29, %c0_30] : memref<2x4x128xf32, #tpu.memory_space<vmem>>, vector<2x4x128xf32>
      tpu.vector_store %arg7[%c0_28, %c0_29, %c0_30], %37 {strides = array<i32>} : memref<2x4x128xf32, #tpu.memory_space<vmem>>, vector<2x4x128xf32>,
    } else {
    }
    %c0 = arith.constant 0 : index
    %c0_1 = arith.constant 0 : index
    %c0_2 = arith.constant 0 : index
    %3 = vector.load %arg2[%c0, %c0_1, %c0_2] : memref<1x2x128xf32, #tpu.memory_space<vmem>>, vector<1x2x128xf32>
    %4 = vector.shape_cast %3 : vector<1x2x128xf32> to vector<2x128xf32>
    %5 = vector.shape_cast %4 : vector<2x128xf32> to vector<2x1x128xf32>
    %c0_3 = arith.constant 0 : index
    %c0_4 = arith.constant 0 : index
    %c0_5 = arith.constant 0 : index
    %6 = vector.load %arg3[%c0_3, %c0_4, %c0_5] : memref<1x2x128xf32, #tpu.memory_space<vmem>>, vector<1x2x128xf32>
    %7 = vector.shape_cast %6 : vector<1x2x128xf32> to vector<2x128xf32>
    %8 = vector.shape_cast %7 : vector<2x128xf32> to vector<2x1x128xf32>
    %c0_6 = arith.constant 0 : index
    %c0_7 = arith.constant 0 : index
    %c0_8 = arith.constant 0 : index
    %9 = vector.load %arg4[%c0_6, %c0_7, %c0_8] : memref<1x4x128xf32, #tpu.memory_space<vmem>>, vector<1x4x128xf32>
    %10 = vector.shape_cast %9 : vector<1x4x128xf32> to vector<4x128xf32>
    %11 = vector.shape_cast %10 : vector<4x128xf32> to vector<1x4x128xf32>
    %c0_9 = arith.constant 0 : index
    %c0_10 = arith.constant 0 : index
    %c0_11 = arith.constant 0 : index
    %12 = vector.load %arg5[%c0_9, %c0_10, %c0_11] : memref<1x4x128xf32, #tpu.memory_space<vmem>>, vector<1x4x128xf32>
    %13 = vector.shape_cast %12 : vector<1x4x128xf32> to vector<4x128xf32>
    %14 = vector.shape_cast %13 : vector<4x128xf32> to vector<1x4x128xf32>
    %c0_12 = arith.constant 0 : index
    %c0_13 = arith.constant 0 : index
    %c0_14 = arith.constant 0 : index
    %15 = vector.load %arg6[%c0_12, %c0_13, %c0_14] : memref<2x4x128xf32, #tpu.memory_space<vmem>>, vector<2x4x128xf32>
    %16 = vector.broadcast %5 : vector<2x1x128xf32> to vector<2x4x128xf32>
    %17 = vector.broadcast %11 : vector<1x4x128xf32> to vector<2x4x128xf32>
    %18 = arith.mulf %16, %17 : vector<2x4x128xf32>
    %19 = vector.broadcast %8 : vector<2x1x128xf32> to vector<2x4x128xf32>
    %20 = vector.broadcast %14 : vector<1x4x128xf32> to vector<2x4x128xf32>
    %21 = arith.mulf %19, %20 : vector<2x4x128xf32>
    %22 = arith.subf %18, %21 : vector<2x4x128xf32>
    %23 = arith.addf %15, %22 : vector<2x4x128xf32>
    %c0_15 = arith.constant 0 : index
    %c0_16 = arith.constant 0 : index
    %c0_17 = arith.constant 0 : index
    %24 = vector.load %arg6[%c0_15, %c0_16, %c0_17] : memref<2x4x128xf32, #tpu.memory_space<vmem>>, vector<2x4x128xf32>
    tpu.vector_store %arg6[%c0_15, %c0_16, %c0_17], %23 {strides = array<i32>} : memref<2x4x128xf32, #tpu.memory_space<vmem>>, vector<2x4x128xf32>,
    %c0_18 = arith.constant 0 : index
    %c0_19 = arith.constant 0 : index
    %c0_20 = arith.constant 0 : index
    %25 = vector.load %arg7[%c0_18, %c0_19, %c0_20] : memref<2x4x128xf32, #tpu.memory_space<vmem>>, vector<2x4x128xf32>
    %26 = vector.broadcast %5 : vector<2x1x128xf32> to vector<2x4x128xf32>
    %27 = vector.broadcast %14 : vector<1x4x128xf32> to vector<2x4x128xf32>
    %28 = arith.mulf %26, %27 : vector<2x4x128xf32>
    %29 = vector.broadcast %8 : vector<2x1x128xf32> to vector<2x4x128xf32>
    %30 = vector.broadcast %11 : vector<1x4x128xf32> to vector<2x4x128xf32>
    %31 = arith.mulf %29, %30 : vector<2x4x128xf32>
    %32 = arith.addf %28, %31 : vector<2x4x128xf32>
    %33 = arith.addf %25, %32 : vector<2x4x128xf32>
    %c0_21 = arith.constant 0 : index
    %c0_22 = arith.constant 0 : index
    %c0_23 = arith.constant 0 : index
    %34 = vector.load %arg7[%c0_21, %c0_22, %c0_23] : memref<2x4x128xf32, #tpu.memory_space<vmem>>, vector<2x4x128xf32>
    tpu.vector_store %arg7[%c0_21, %c0_22, %c0_23], %33 {strides = array<i32>} : memref<2x4x128xf32, #tpu.memory_space<vmem>>, vector<2x4x128xf32>,
    return
  }
  func.func @transform_0(%arg0: i32, %arg1: i32) -> (i32, i32, i32) {
    %c0_i32 = arith.constant 0 : i32
    %c0_i32_0 = arith.constant 0 : i32
    return %arg1, %c0_i32, %arg0 : i32, i32, i32
  }
  func.func @transform_1(%arg0: i32, %arg1: i32) -> (i32, i32, i32) {
    %c0_i32 = arith.constant 0 : i32
    %c0_i32_0 = arith.constant 0 : i32
    return %arg1, %c0_i32, %arg0 : i32, i32, i32
  }
  func.func @transform_2(%arg0: i32, %arg1: i32) -> (i32, i32, i32) {
    %c0_i32 = arith.constant 0 : i32
    %c0_i32_0 = arith.constant 0 : i32
    return %arg1, %c0_i32, %arg0 : i32, i32, i32
  }
  func.func @transform_3(%arg0: i32, %arg1: i32) -> (i32, i32, i32) {
    %c0_i32 = arith.constant 0 : i32
    %c0_i32_0 = arith.constant 0 : i32
    return %arg1, %c0_i32, %arg0 : i32, i32, i32
  }
  func.func @transform_4(%arg0: i32, %arg1: i32) -> (i32, i32, i32) {
    %c0_i32 = arith.constant 0 : i32
    %c0_i32_0 = arith.constant 0 : i32
    %c0_i32_1 = arith.constant 0 : i32
    return %c0_i32, %c0_i32_0, %arg0 : i32, i32, i32
  }
  func.func @transform_5(%arg0: i32, %arg1: i32) -> (i32, i32, i32) {
    %c0_i32 = arith.constant 0 : i32
    %c0_i32_0 = arith.constant 0 : i32
    %c0_i32_1 = arith.constant 0 : i32
    return %c0_i32, %c0_i32_0, %arg0 : i32, i32, i32
  }
}

</mosaic_0001>

<llo_original>
// kernel: tpu_custom_call.1
$region0: #{tpu_custom_call.1}
  #allocation0 [shape = 'u32[]', space=smem, size = 0x4, offset = 0x4, fixed_abs, tag = 'smem constant byte address 0x4 - core index']
  #allocation1 [shape = 'u32[144,128]{1,0:T(1,128)}', space=vmem, size = 0x12000, scoped, tag = 'internal scratch']
  %s0 = inlined_call_operand.hbm [shape: f32[4,2,128], index: 0, kind: input, shape index: {}]
  %s1 = inlined_call_operand.hbm [shape: f32[4,2,128], index: 1, kind: input, shape index: {}]
  %s2 = inlined_call_operand.hbm [shape: f32[4,4,128], index: 2, kind: input, shape index: {}]
  %s3 = inlined_call_operand.hbm [shape: f32[4,4,128], index: 3, kind: input, shape index: {}]
  %s4 = inlined_call_operand.hbm [shape: f32[2,4,128], index: 4, kind: output, shape index: {0}]
  %s5 = inlined_call_operand.hbm [shape: f32[2,4,128], index: 5, kind: output, shape index: {1}]
  %6 = xla_tuple %s4, %s5
  %s7 = sld [smem:[#allocation0]]
  $region77: #{tpu_custom_call.1} parent=0
    _
  %s9 = ssub.s32 1, %s7
  %s10 = scalar_select 0, %s9, %s7
  $region1: #{tpu_custom_call.1} parent=0
    #allocation2 [shape = 'u8[2048]{0}', space=vmem, size = 0x800, scoped, tag = 'input window, operand 0']
    #allocation3 [shape = 's32[2]{0}', space=sflag, size = 0x8, scoped, tag = 'scoped memory for tpu_custom_call.1']
    #allocation4 [shape = 's32[2]{0}', space=sflag, size = 0x8, scoped, tag = 'scoped memory for tpu_custom_call.1']
    #allocation5 [shape = 'u8[2048]{0}', space=vmem, size = 0x800, scoped, tag = 'input window, operand 1']
    #allocation6 [shape = 's32[2]{0}', space=sflag, size = 0x8, scoped, tag = 'scoped memory for tpu_custom_call.1']
    #allocation7 [shape = 'u8[4096]{0}', space=vmem, size = 0x1000, scoped, tag = 'input window, operand 2']
    #allocation8 [shape = 'u8[4096]{0}', space=vmem, size = 0x1000, scoped, tag = 'input window, operand 3']
    #allocation9 [shape = 's32[2]{0}', space=sflag, size = 0x8, scoped, tag = 'scoped memory for tpu_custom_call.1']
    #allocation10 [shape = 'u8[4096]{0}', space=vmem, size = 0x1000, scoped, tag = 'output window, operand 0, single buffered']
    #allocation11 [shape = 'u8[4096]{0}', space=vmem, size = 0x1000, scoped, tag = 'output window, operand 1, single buffered']
    #allocation12 [shape = 's32[1]{0}', space=sflag, size = 0x4, scoped, tag = 'scoped memory for tpu_custom_call.1']
    %11 = vsyncpa [#allocation3], 0
    %s12 = scalar_lea.sflag [#allocation3], 1
    %13 = vsyncpa %s12, 0
    %14 = vsyncpa [#allocation6], 0
    %s15 = scalar_lea.sflag [#allocation6], 1
    %16 = vsyncpa %s15, 0
    %17 = vsyncpa [#allocation9], 0
    %s18 = scalar_lea.sflag [#allocation9], 1
    %19 = vsyncpa %s18, 0
    %20 = vsyncpa [#allocation4], 0
    %21 = vsyncpa [#allocation12], 0
    loop: start=0, step=1, limit=6
    $region2: #{tpu_custom_call.1} parent=1 // loop_pre_header
      _
    $region3: #{tpu_custom_call.1} parent=1 // loop_header
      %s23 = sphi 0, %s27
      %p24 = scmp.ge.s32.totalorder %s23, 6
      %s30 = sphi 0, %s42
      %s31 = sphi 0, %s38
      %s32 = sphi 0, %s30
      %s33 = sphi 0, %s31
      %s34 = sphi 0, %s32
      %s35 = sphi 0, %s33
      %s47 = sphi 0, %s49
      %s50 = sphi 0, %s47
      %s51 = sphi 0, %s50
      %s67 = sphi 0, %s51
      %s75 = sphi 0, %s77
      %s78 = sphi 0, %s75
      %s79 = sphi 0, %s78
      %s95 = sphi 0, %s79
      %s103 = sphi 0, %s105
      %s106 = sphi 0, %s103
      %s107 = sphi 0, %s106
      %s123 = sphi 0, %s107
      %s131 = sphi 0, %s133
      %s134 = sphi 0, %s131
      %s135 = sphi 0, %s134
      %s151 = sphi 0, %s135
      %s157 = sphi 0, %s159
      %s160 = sphi 0, %s157
      %s161 = sphi 0, %s160
      %s177 = sphi 0, %s161
      %s183 = sphi 0, %s185
      %s186 = sphi 0, %s183
      %s187 = sphi 0, %s186
      %s203 = sphi 0, %s187
    $region4: #{tpu_custom_call.1} parent=1 // loop_header_branch
      %26 = sbr.rel (%p24) target = $region8
    $region5: #{tpu_custom_call.1} parent=1 // loop_body
      %s28 = ssub.s32 %s23, 1
      %s29 = ssub.s32 %s23, 2
      %s36 = sadd.s32 1, %s31
      %p37 = scmp.ge.s32.totalorder %s36, 4
      %s38 = scalar_select %p37, 0, %s36
      %s39 = sadd.s32 1, %s30
      %s40 = scalar_select %p37, %s39, %s30
      %p41 = scmp.ge.s32.totalorder %s40, 1
      %s42 = scalar_select %p41, 0, %s40
      %s43 = ssub.s32 %s31, %s38
      %s44 = ssub.s32 %s30, %s42
      %s45 = sor.u32 %s43, %s44
      %p46 = scmp.eq.s32.totalorder %s45, 0
      %s48 = sadd.s32 %s47, 1
      %s49 = scalar_select %p46, %s47, %s48
      %p52 = pneg %p46
      %p53 = scmp.eq.s32.totalorder %s23, 3
      %p54 = por %p52, %p53
      %p55 = scmp.ne.s32.totalorder %s47, %s50
      %p56 = scmp.eq.s32.totalorder %s23, 0
      %p57 = por %p55, %p56
      %p58 = scmp.ne.s32.totalorder %s47, %s50
      %p59 = scmp.eq.s32.totalorder %s28, 3
      %p60 = por %p58, %p59
      %p61 = scmp.ne.s32.totalorder %s50, %s51
      %p62 = scmp.eq.s32.totalorder %s28, 0
      %p63 = por %p61, %p62
      %p64 = scmp.ne.s32.totalorder %s50, %s51
      %p65 = scmp.eq.s32.totalorder %s29, 3
      %p66 = por %p64, %p65
      %p68 = scmp.ne.s32.totalorder %s51, %s67
      %p69 = scmp.eq.s32.totalorder %s29, 0
      %p70 = por %p68, %p69
      %s71 = ssub.s32 %s31, %s38
      %s72 = ssub.s32 %s30, %s42
      %s73 = sor.u32 %s71, %s72
      %p74 = scmp.eq.s32.totalorder %s73, 0
      %s76 = sadd.s32 %s75, 1
      %s77 = scalar_select %p74, %s75, %s76
      %p80 = pneg %p74
      %p81 = scmp.eq.s32.totalorder %s23, 3
      %p82 = por %p80, %p81
      %p83 = scmp.ne.s32.totalorder %s75, %s78
      %p84 = scmp.eq.s32.totalorder %s23, 0
      %p85 = por %p83, %p84
      %p86 = scmp.ne.s32.totalorder %s75, %s78
      %p87 = scmp.eq.s32.totalorder %s28, 3
      %p88 = por %p86, %p87
      %p89 = scmp.ne.s32.totalorder %s78, %s79
      %p90 = scmp.eq.s32.totalorder %s28, 0
      %p91 = por %p89, %p90
      %p92 = scmp.ne.s32.totalorder %s78, %s79
      %p93 = scmp.eq.s32.totalorder %s29, 3
      %p94 = por %p92, %p93
      %p96 = scmp.ne.s32.totalorder %s79, %s95
      %p97 = scmp.eq.s32.totalorder %s29, 0
      %p98 = por %p96, %p97
      %s99 = ssub.s32 %s31, %s38
      %s100 = ssub.s32 %s30, %s42
      %s101 = sor.u32 %s99, %s100
      %p102 = scmp.eq.s32.totalorder %s101, 0
      %s104 = sadd.s32 %s103, 1
      %s105 = scalar_select %p102, %s103, %s104
      %p108 = pneg %p102
      %p109 = scmp.eq.s32.totalorder %s23, 3
      %p110 = por %p108, %p109
      %p111 = scmp.ne.s32.totalorder %s103, %s106
      %p112 = scmp.eq.s32.totalorder %s23, 0
      %p113 = por %p111, %p112
      %p114 = scmp.ne.s32.totalorder %s103, %s106
      %p115 = scmp.eq.s32.totalorder %s28, 3
      %p116 = por %p114, %p115
      %p117 = scmp.ne.s32.totalorder %s106, %s107
      %p118 = scmp.eq.s32.totalorder %s28, 0
      %p119 = por %p117, %p118
      %p120 = scmp.ne.s32.totalorder %s106, %s107
      %p121 = scmp.eq.s32.totalorder %s29, 3
      %p122 = por %p120, %p121
      %p124 = scmp.ne.s32.totalorder %s107, %s123
      %p125 = scmp.eq.s32.totalorder %s29, 0
      %p126 = por %p124, %p125
      %s127 = ssub.s32 %s31, %s38
      %s128 = ssub.s32 %s30, %s42
      %s129 = sor.u32 %s127, %s128
      %p130 = scmp.eq.s32.totalorder %s129, 0
      %s132 = sadd.s32 %s131, 1
      %s133 = scalar_select %p130, %s131, %s132
      %p136 = pneg %p130
      %p137 = scmp.eq.s32.totalorder %s23, 3
      %p138 = por %p136, %p137
      %p139 = scmp.ne.s32.totalorder %s131, %s134
      %p140 = scmp.eq.s32.totalorder %s23, 0
      %p141 = por %p139, %p140
      %p142 = scmp.ne.s32.totalorder %s131, %s134
      %p143 = scmp.eq.s32.totalorder %s28, 3
      %p144 = por %p142, %p143
      %p145 = scmp.ne.s32.totalorder %s134, %s135
      %p146 = scmp.eq.s32.totalorder %s28, 0
      %p147 = por %p145, %p146
      %p148 = scmp.ne.s32.totalorder %s134, %s135
      %p149 = scmp.eq.s32.totalorder %s29, 3
      %p150 = por %p148, %p149
      %p152 = scmp.ne.s32.totalorder %s135, %s151
      %p153 = scmp.eq.s32.totalorder %s29, 0
      %p154 = por %p152, %p153
      %s155 = ssub.s32 %s30, %s42
      %p156 = scmp.eq.s32.totalorder %s155, 0
      %s158 = sadd.s32 %s157, 1
      %s159 = scalar_select %p156, %s157, %s158
      %p162 = pneg %p156
      %p163 = scmp.eq.s32.totalorder %s23, 3
      %p164 = por %p162, %p163
      %p165 = scmp.ne.s32.totalorder %s157, %s160
      %p166 = scmp.eq.s32.totalorder %s23, 0
      %p167 = por %p165, %p166
      %p168 = scmp.ne.s32.totalorder %s157, %s160
      %p169 = scmp.eq.s32.totalorder %s28, 3
      %p170 = por %p168, %p169
      %p171 = scmp.ne.s32.totalorder %s160, %s161
      %p172 = scmp.eq.s32.totalorder %s28, 0
      %p173 = por %p171, %p172
      %p174 = scmp.ne.s32.totalorder %s160, %s161
      %p175 = scmp.eq.s32.totalorder %s29, 3
      %p176 = por %p174, %p175
      %p178 = scmp.ne.s32.totalorder %s161, %s177
      %p179 = scmp.eq.s32.totalorder %s29, 0
      %p180 = por %p178, %p179
      %s181 = ssub.s32 %s30, %s42
      %p182 = scmp.eq.s32.totalorder %s181, 0
      %s184 = sadd.s32 %s183, 1
      %s185 = scalar_select %p182, %s183, %s184
      %p188 = pneg %p182
      %p189 = scmp.eq.s32.totalorder %s23, 3
      %p190 = por %p188, %p189
      %p191 = scmp.ne.s32.totalorder %s183, %s186
      %p192 = scmp.eq.s32.totalorder %s23, 0
      %p193 = por %p191, %p192
      %p194 = scmp.ne.s32.totalorder %s183, %s186
      %p195 = scmp.eq.s32.totalorder %s28, 3
      %p196 = por %p194, %p195
      %p197 = scmp.ne.s32.totalorder %s186, %s187
      %p198 = scmp.eq.s32.totalorder %s28, 0
      %p199 = por %p197, %p198
      %p200 = scmp.ne.s32.totalorder %s186, %s187
      %p201 = scmp.eq.s32.totalorder %s29, 3
      %p202 = por %p200, %p201
      %p204 = scmp.ne.s32.totalorder %s187, %s203
      %p205 = scmp.eq.s32.totalorder %s29, 0
      %p206 = por %p204, %p205
      %p207 = scmp.le.s32.totalorder 1, %s23
      %p208 = scmp.lt.s32.totalorder %s23, 5
      %p209 = pnand %p207, %p208
      %p210 = pneg %p209
      // Predicated region
      $region9: #{tpu_custom_call.1} parent=5 // pred_check
        _
      $region10: #{tpu_custom_call.1} parent=5 // pred_check_branch
        %212 = sbr.rel (%p209) target = $region12
      $region11: #{tpu_custom_call.1} parent=5 // pred_region
        %s213 = ssub.s32 %s23, 1
      $region12: #{tpu_custom_call.1} parent=5 // pred_fallthru
        _
      %p214 = scmp.lt.s32.totalorder %s23, 4
      // Predicated region
      $region13: #{tpu_custom_call.1} parent=5 // pred_check
        %p215 = pneg %p214
      $region14: #{tpu_custom_call.1} parent=5 // pred_check_branch
        %217 = sbr.rel (%p215) target = $region16
      $region15: #{tpu_custom_call.1} parent=5 // pred_region
        // Predicated region
        $region17: #{tpu_custom_call.1} parent=15 // pred_check
          %p218 = pneg %p57
        $region18: #{tpu_custom_call.1} parent=15 // pred_check_branch
          %220 = sbr.rel (%p218) target = $region20
        $region19: #{tpu_custom_call.1} parent=15 // pred_region
          %s221 = sand.u32 %s47, 1
          %s222 = scalar_lea.sflag [#allocation3], %s221
          %s223 = sand.u32 %s47, 1
          %s224 = smul.addr %s223, 2
          %s225 = scalar_lea.vmem [#allocation2], %s224
          %s227 = ssub.s32 32, 32
          %228 = vsyncadd %s222, %s227
          %s229 = sadd.s32 %s30, %s31
          %s230 = smul.addr %s229, 32
          %s231 = scalar_lea.hbm %s0, %s230
          %s233 = sshll.u32 %s225, 4
          %s234 = int_to_ptr.vmem [resolvable:$true] %s233
          %236 = dma.hbm_to_vmem [thread:$0]  %s231, 32, %s234, %s222
        $region20: #{tpu_custom_call.1} parent=15 // pred_fallthru
          _
        // Predicated region
        $region21: #{tpu_custom_call.1} parent=15 // pred_check
          %p237 = pneg %p85
        $region22: #{tpu_custom_call.1} parent=15 // pred_check_branch
          %239 = sbr.rel (%p237) target = $region24
        $region23: #{tpu_custom_call.1} parent=15 // pred_region
          %s240 = sand.u32 %s23, 1
          %s241 = scalar_lea.sflag [#allocation6], %s240
          %s242 = sand.u32 %s75, 1
          %s243 = smul.addr %s242, 2
          %s244 = scalar_lea.vmem [#allocation5], %s243
          %s246 = ssub.s32 32, 32
          %247 = vsyncadd %s241, %s246
          %s248 = sadd.s32 %s30, %s31
          %s249 = smul.addr %s248, 32
          %s250 = scalar_lea.hbm %s1, %s249
          %s252 = sshll.u32 %s244, 4
          %s253 = int_to_ptr.vmem [resolvable:$true] %s252
          %255 = dma.hbm_to_vmem [thread:$0]  %s250, 32, %s253, %s241
        $region24: #{tpu_custom_call.1} parent=15 // pred_fallthru
          _
        // Predicated region
        $region25: #{tpu_custom_call.1} parent=15 // pred_check
          %p256 = pneg %p113
        $region26: #{tpu_custom_call.1} parent=15 // pred_check_branch
          %258 = sbr.rel (%p256) target = $region28
        $region27: #{tpu_custom_call.1} parent=15 // pred_region
          %s259 = sand.u32 %s23, 1
          %s260 = scalar_lea.sflag [#allocation6], %s259
          %s261 = sand.u32 %s103, 1
          %s262 = smul.addr %s261, 4
          %s263 = scalar_lea.vmem [#allocation7], %s262
          %s265 = ssub.s32 64, 64
          %266 = vsyncadd %s260, %s265
          %s267 = sadd.s32 %s30, %s31
          %s268 = smul.addr %s267, 64
          %s269 = scalar_lea.hbm %s2, %s268
          %s271 = sshll.u32 %s263, 4
          %s272 = int_to_ptr.vmem [resolvable:$true] %s271
          %274 = dma.hbm_to_vmem [thread:$0]  %s269, 64, %s272, %s260
        $region28: #{tpu_custom_call.1} parent=15 // pred_fallthru
          _
        // Predicated region
        $region29: #{tpu_custom_call.1} parent=15 // pred_check
          %p275 = pneg %p141
        $region30: #{tpu_custom_call.1} parent=15 // pred_check_branch
          %277 = sbr.rel (%p275) target = $region32
        $region31: #{tpu_custom_call.1} parent=15 // pred_region
          %s278 = sand.u32 %s131, 1
          %s279 = scalar_lea.sflag [#allocation9], %s278
          %s280 = sand.u32 %s131, 1
          %s281 = smul.addr %s280, 4
          %s282 = scalar_lea.vmem [#allocation8], %s281
          %s284 = ssub.s32 64, 64
          %285 = vsyncadd %s279, %s284
          %s286 = sadd.s32 %s30, %s31
          %s287 = smul.addr %s286, 64
          %s288 = scalar_lea.hbm %s3, %s287
          %s290 = sshll.u32 %s282, 4
          %s291 = int_to_ptr.vmem [resolvable:$true] %s290
          %293 = dma.hbm_to_vmem [thread:$0]  %s288, 64, %s291, %s279
        $region32: #{tpu_custom_call.1} parent=15 // pred_fallthru
          _
      $region16: #{tpu_custom_call.1} parent=5 // pred_fallthru
        _
      %p294 = scmp.le.s32.totalorder 1, %s23
      %p295 = scmp.lt.s32.totalorder %s23, 5
      %p296 = pnand %p294, %p295
      %p297 = pneg %p296
      // Predicated region
      $region33: #{tpu_custom_call.1} parent=5 // pred_check
        _
      $region34: #{tpu_custom_call.1} parent=5 // pred_check_branch
        %299 = sbr.rel (%p296) target = $region36
      $region35: #{tpu_custom_call.1} parent=5 // pred_region
        %s300 = ssub.s32 %s23, 1
        %s301 = sand.u32 %s50, 1
        %s302 = scalar_lea.sflag [#allocation3], %s301
        %s303 = sand.u32 %s50, 1
        %s304 = smul.addr %s303, 2
        %s305 = scalar_lea.vmem [#allocation2], %s304
        // Predicated region
        $region37: #{tpu_custom_call.1} parent=35 // pred_check
          %p306 = pneg %p63
        $region38: #{tpu_custom_call.1} parent=35 // pred_check_branch
          %308 = sbr.rel (%p306) target = $region40
        $region39: #{tpu_custom_call.1} parent=35 // pred_region
          %309 = dma.done %s302, 32
        $region40: #{tpu_custom_call.1} parent=35 // pred_fallthru
          _
        %s310 = sand.u32 %s28, 1
        %s311 = scalar_lea.sflag [#allocation6], %s310
        %s312 = sand.u32 %s78, 1
        %s313 = smul.addr %s312, 2
        %s314 = scalar_lea.vmem [#allocation5], %s313
        // Predicated region
        $region41: #{tpu_custom_call.1} parent=35 // pred_check
          %p315 = pneg %p91
        $region42: #{tpu_custom_call.1} parent=35 // pred_check_branch
          %317 = sbr.rel (%p315) target = $region44
        $region43: #{tpu_custom_call.1} parent=35 // pred_region
          %318 = dma.done %s311, 32
        $region44: #{tpu_custom_call.1} parent=35 // pred_fallthru
          _
        %s319 = sand.u32 %s28, 1
        %s320 = scalar_lea.sflag [#allocation6], %s319
        %s321 = sand.u32 %s106, 1
        %s322 = smul.addr %s321, 4
        %s323 = scalar_lea.vmem [#allocation7], %s322
        // Predicated region
        $region45: #{tpu_custom_call.1} parent=35 // pred_check
          %p324 = pneg %p119
        $region46: #{tpu_custom_call.1} parent=35 // pred_check_branch
          %326 = sbr.rel (%p324) target = $region48
        $region47: #{tpu_custom_call.1} parent=35 // pred_region
          %327 = dma.done %s320, 64
        $region48: #{tpu_custom_call.1} parent=35 // pred_fallthru
          _
        %s328 = sand.u32 %s134, 1
        %s329 = scalar_lea.sflag [#allocation9], %s328
        %s330 = sand.u32 %s134, 1
        %s331 = smul.addr %s330, 4
        %s332 = scalar_lea.vmem [#allocation8], %s331
        // Predicated region
        $region49: #{tpu_custom_call.1} parent=35 // pred_check
          %p333 = pneg %p147
        $region50: #{tpu_custom_call.1} parent=35 // pred_check_branch
          %335 = sbr.rel (%p333) target = $region52
        $region51: #{tpu_custom_call.1} parent=35 // pred_region
          %336 = dma.done %s329, 64
        $region52: #{tpu_custom_call.1} parent=35 // pred_fallthru
          _
        %s337 = sand.u32 %s50, 1
        %s338 = scalar_lea.sflag [#allocation3], %s337
        %s339 = sand.u32 %s50, 1
        %s340 = smul.addr %s339, 2
        %s341 = scalar_lea.vmem [#allocation2], %s340
        %p342 = pneg %p63
        %p343 = pneg %p60
        %s344 = sand.u32 %s28, 1
        %s345 = scalar_lea.sflag [#allocation6], %s344
        %s346 = sand.u32 %s78, 1
        %s347 = smul.addr %s346, 2
        %s348 = scalar_lea.vmem [#allocation5], %s347
        %p349 = pneg %p91
        %p350 = pneg %p88
        %s351 = sand.u32 %s28, 1
        %s352 = scalar_lea.sflag [#allocation6], %s351
        %s353 = sand.u32 %s106, 1
        %s354 = smul.addr %s353, 4
        %s355 = scalar_lea.vmem [#allocation7], %s354
        %p356 = pneg %p119
        %p357 = pneg %p116
        %s358 = sand.u32 %s134, 1
        %s359 = scalar_lea.sflag [#allocation9], %s358
        %s360 = sand.u32 %s134, 1
        %s361 = smul.addr %s360, 4
        %s362 = scalar_lea.vmem [#allocation8], %s361
        %p363 = pneg %p147
        %p364 = pneg %p144
        %p365 = pneg %p173
        %p366 = pneg %p170
        %p367 = pneg %p199
        %p368 = pneg %p196
        %p369 = scmp.eq.s32.totalorder %s33, 0
        // Predicated region
        $region53: #{tpu_custom_call.1} parent=35 // pred_check
          %p370 = pneg %p369
        $region54: #{tpu_custom_call.1} parent=35 // pred_check_branch
          %372 = sbr.rel (%p370) target = $region56
        $region55: #{tpu_custom_call.1} parent=35 // pred_region
          %373 = vst [vmem:[#allocation10] sm:$0xf] 0.0
          %374 = vst [vmem:[#allocation10 + $0x4] sm:$0xf] 0.0
          %375 = vst [vmem:[#allocation11] sm:$0xf] 0.0
          %376 = vst [vmem:[#allocation11 + $0x4] sm:$0xf] 0.0
        $region56: #{tpu_custom_call.1} parent=35 // pred_fallthru
          _
        %v377 = vld [vmem:[%s305] sm:$0x3]
        %v380 = vunpack.c.l.s4 1966171168
        %v381 = vunpack.c.0.s8 %v380
        %v382 = vlaneseq
        %v383 = vshrl.u32 %v382, 7
        %v384 = vsub.s32 %v381, %v383
        %v385 = vrot.slane %v377, %v384
        %v386 = vcombine.high %v385, %v385
        %v388 = vunpack.c.l.s4 1966171168
        %v389 = vunpack.c.0.s8 %v388
        %v390 = vlaneseq
        %v391 = vshrl.u32 %v390, 7
        %v392 = vsub.s32 %v389, %v391
        %v393 = vrot.slane %v385, %v392
        %v395 = vunpack.c.l.s4 1966171168
        %v396 = vunpack.c.0.s8 %v395
        %v397 = vlaneseq
        %v398 = vshrl.u32 %v397, 7
        %v399 = vsub.s32 %v396, %v398
        %v400 = vrot.slane %v386, %v399
        %v401 = vld [vmem:[%s314] sm:$0x3]
        %v404 = vunpack.c.l.s4 1966171168
        %v405 = vunpack.c.0.s8 %v404
        %v406 = vlaneseq
        %v407 = vshrl.u32 %v406, 7
        %v408 = vsub.s32 %v405, %v407
        %v409 = vrot.slane %v401, %v408
        %v410 = vcombine.high %v409, %v409
        %v412 = vunpack.c.l.s4 1966171168
        %v413 = vunpack.c.0.s8 %v412
        %v414 = vlaneseq
        %v415 = vshrl.u32 %v414, 7
        %v416 = vsub.s32 %v413, %v415
        %v417 = vrot.slane %v409, %v416
        %v419 = vunpack.c.l.s4 1966171168
        %v420 = vunpack.c.0.s8 %v419
        %v421 = vlaneseq
        %v422 = vshrl.u32 %v421, 7
        %v423 = vsub.s32 %v420, %v422
        %v424 = vrot.slane %v410, %v423
        %v425 = vld [vmem:[%s323] sm:$0xf]
        %v426 = vld [vmem:[%s332] sm:$0xf]
        %v427 = vld [vmem:[#allocation10] sm:$0xf]
        %v428 = vld [vmem:[#allocation10 + $0x4] sm:$0xf]
        %v429 = vlaneseq
        %v430 = vshrl.u32 %v429, 7
        %v431 = vsub.s32 0, %v430
        %v432 = vrot.slane %v393, %v431
        %v433 = vlaneseq
        %v434 = vshrl.u32 %v433, 7
        %v435 = vsub.s32 0, %v434
        %v436 = vrot.slane %v400, %v435
        %v439 = vmul.f32 %v432, %v425
        %v440 = vmul.f32 %v436, %v425
        %v441 = vlaneseq
        %v442 = vshrl.u32 %v441, 7
        %v443 = vsub.s32 0, %v442
        %v444 = vrot.slane %v417, %v443
        %v445 = vlaneseq
        %v446 = vshrl.u32 %v445, 7
        %v447 = vsub.s32 0, %v446
        %v448 = vrot.slane %v424, %v447
        %v451 = vmul.f32 %v444, %v426
        %v452 = vmul.f32 %v448, %v426
        %v453 = vsub.f32 %v439, %v451
        %v454 = vsub.f32 %v440, %v452
        %v455 = vadd.f32 %v427, %v453
        %v456 = vadd.f32 %v428, %v454
        %457 = vst [vmem:[#allocation10] sm:$0xf] %v455
        %458 = vst [vmem:[#allocation10 + $0x4] sm:$0xf] %v456
        %v459 = vld [vmem:[#allocation11] sm:$0xf]
        %v460 = vld [vmem:[#allocation11 + $0x4] sm:$0xf]
        %v461 = vmul.f32 %v432, %v426
        %v462 = vmul.f32 %v436, %v426
        %v463 = vmul.f32 %v444, %v425
        %v464 = vmul.f32 %v448, %v425
        %v465 = vadd.f32 %v461, %v463
        %v466 = vadd.f32 %v462, %v464
        %v467 = vadd.f32 %v459, %v465
        %v468 = vadd.f32 %v460, %v466
        %469 = vst [vmem:[#allocation11] sm:$0xf] %v467
        %470 = vst [vmem:[#allocation11 + $0x4] sm:$0xf] %v468
        // Predicated region
        $region57: #{tpu_custom_call.1} parent=35 // pred_check
          %p471 = pneg %p170
        $region58: #{tpu_custom_call.1} parent=35 // pred_check_branch
          %473 = sbr.rel (%p471) target = $region60
        $region59: #{tpu_custom_call.1} parent=35 // pred_region
          %s475 = ssub.s32 128, 128
          %476 = vsyncadd [#allocation4], %s475
          %s477 = smul.addr %s32, 64
          %s478 = scalar_lea.hbm %s4, %s477
          %s479 = sshll.u32 [#allocation10], 4
          %s480 = int_to_ptr.vmem [resolvable:$true] %s479
          %485 = dma.vmem_to_hbm [thread:$0]  %s480, 128, %s478, [#allocation4], 64, 64, 4
        $region60: #{tpu_custom_call.1} parent=35 // pred_fallthru
          _
        // Predicated region
        $region61: #{tpu_custom_call.1} parent=35 // pred_check
          %p486 = pneg %p196
        $region62: #{tpu_custom_call.1} parent=35 // pred_check_branch
          %488 = sbr.rel (%p486) target = $region64
        $region63: #{tpu_custom_call.1} parent=35 // pred_region
          %s490 = ssub.s32 128, 128
          %491 = vsyncadd [#allocation12], %s490
          %s492 = smul.addr %s32, 64
          %s493 = scalar_lea.hbm %s5, %s492
          %s494 = sshll.u32 [#allocation11], 4
          %s495 = int_to_ptr.vmem [resolvable:$true] %s494
          %500 = dma.vmem_to_hbm [thread:$0]  %s495, 128, %s493, [#allocation12], 64, 64, 4
        $region64: #{tpu_custom_call.1} parent=35 // pred_fallthru
          _
        // Predicated region
        $region65: #{tpu_custom_call.1} parent=35 // pred_check
          %p501 = pneg %p170
        $region66: #{tpu_custom_call.1} parent=35 // pred_check_branch
          %503 = sbr.rel (%p501) target = $region68
        $region67: #{tpu_custom_call.1} parent=35 // pred_region
          %504 = dma.done [#allocation4], 128
        $region68: #{tpu_custom_call.1} parent=35 // pred_fallthru
          _
        // Predicated region
        $region69: #{tpu_custom_call.1} parent=35 // pred_check
          %p505 = pneg %p196
        $region70: #{tpu_custom_call.1} parent=35 // pred_check_branch
          %507 = sbr.rel (%p505) target = $region72
        $region71: #{tpu_custom_call.1} parent=35 // pred_region
          %508 = dma.done [#allocation12], 128
        $region72: #{tpu_custom_call.1} parent=35 // pred_fallthru
          _
      $region36: #{tpu_custom_call.1} parent=5 // pred_fallthru
        _
      %p509 = scmp.le.s32.totalorder 2, %s23
      // Predicated region
      $region73: #{tpu_custom_call.1} parent=5 // pred_check
        %p510 = pneg %p509
      $region74: #{tpu_custom_call.1} parent=5 // pred_check_branch
        %512 = sbr.rel (%p510) target = $region76
      $region75: #{tpu_custom_call.1} parent=5 // pred_region
        %s513 = ssub.s32 %s23, 2
      $region76: #{tpu_custom_call.1} parent=5 // pred_fallthru
        _
    $region6: #{tpu_custom_call.1} parent=1 // loop_footer
      %s27 = sadd.s32 1, %s23
    $region7: #{tpu_custom_call.1} parent=1 // loop_footer_branch
      %22 = sbr.rel target = $region3
    $region8: #{tpu_custom_call.1} parent=1 // loop_exit
      _
    %514 = vsyncpa [#allocation3], 1
    %s515 = scalar_lea.sflag [#allocation3], 1
    %516 = vsyncpa %s515, 1
    %517 = vsyncpa [#allocation6], 1
    %s518 = scalar_lea.sflag [#allocation6], 1
    %519 = vsyncpa %s518, 1
    %520 = vsyncpa [#allocation9], 1
    %s521 = scalar_lea.sflag [#allocation9], 1
    %522 = vsyncpa %s521, 1
    %523 = vsyncpa [#allocation4], 1
    %s524 = scalar_lea.sflag [#allocation4], 1
    %525 = vsyncpa %s524, 1
    %526 = vsyncpa [#allocation12], 1

</llo_original>
